<compile_context>
chip_gen: v6e
topology: v6e:2x2x1
jax: 0.10.0
libtpu: 0.0.40
codegen_flags: <defaults>
</compile_context>

<pallas_src>
import functools

import jax
import jax.numpy as jnp
from jax.experimental import pallas as pl
from jax.experimental.pallas import tpu as pltpu


def _sttoper_kernel(num_heads, E, Hd, x_ref, p_ref, o_ref):
    x = x_ref[0]                                                     # (S, E) f32
    S = x.shape[0]
    dh = E // num_heads
    scale = 1.0 / (float(dh) ** 0.5)
    E3 = 3 * E

    # --- fused in-projection: one GEMM + one bias add (q|k|v along lanes) ---
    wqkv = p_ref[0:E, 0:E3]                                          # (E, 3E)
    bqkv = p_ref[E:E + 1, 0:E3]                                      # (1, 3E)
    qkv = jnp.dot(x, wqkv, preferred_element_type=jnp.float32) + bqkv  # (S, 3E)
    q = qkv[:, 0:E] * scale                                          # (S, E)
    k = qkv[:, E:2 * E]                                              # (S, E)
    v = qkv[:, 2 * E:E3]                                             # (S, E)

    # --- per-head attention via lane masks built from iota (no captured consts).
    # Masking q isolates head h's lane block in the score contraction; masking v
    # makes each head write only its own output lanes, so concatenating the
    # softmaxed score blocks along lanes and the masked v's along sublanes and
    # doing ONE dot reproduces concat(heads) exactly.
    lane = jax.lax.broadcasted_iota(jnp.int32, (1, E), 1)
    dims = (((1,), (1,)), ((), ()))          # contract last dims: q @ k^T, no transpose
    p_blocks = []
    v_blocks = []
    for h in range(num_heads):
        mask = ((lane >= h * dh) & (lane < (h + 1) * dh)).astype(jnp.float32)
        s = jax.lax.dot_general(q * mask, k, dims,
                                preferred_element_type=jnp.float32)  # (S, S)
        s = s - jnp.max(s, axis=-1, keepdims=True)
        e = jnp.exp(s)
        p_blocks.append(e / jnp.sum(e, axis=-1, keepdims=True))
        v_blocks.append(v * mask)
    p_cat = jnp.concatenate(p_blocks, axis=1)                        # (S, H*S)
    v_cat = jnp.concatenate(v_blocks, axis=0)                        # (H*S, E)
    ctx = jnp.dot(p_cat, v_cat, preferred_element_type=jnp.float32)  # (S, E)

    # --- mean over the sequence as an MXU matmul; the output projection is
    # linear, so pooling first then Wo/bo is exact: mean(ctx@Wo+bo) = mean(ctx)@Wo+bo.
    ones_row = jnp.full((1, S), 1.0 / S, jnp.float32)
    pooled_ctx = jnp.dot(ones_row, ctx, preferred_element_type=jnp.float32)   # (1, E)
    wo = p_ref[0:E, E3:E3 + E]                                       # (E, E)
    bo = p_ref[E + 1:E + 2, 0:E]                                     # (1, E)
    pooled = jnp.dot(pooled_ctx, wo, preferred_element_type=jnp.float32) + bo  # (1, E)

    # --- MLP head: Linear -> GELU -> Linear -> Sigmoid ---
    w1 = p_ref[0:E, E3 + E:E3 + E + Hd]                              # (E, Hd)
    b1 = p_ref[E + 2:E + 3, 0:Hd]                                    # (1, Hd)
    h1 = jnp.dot(pooled, w1, preferred_element_type=jnp.float32) + b1  # (1, Hd)
    # TODO(synk): PyTorch nn.GELU defaults to the exact erf form; tanh approximation used.
    g = 0.5 * h1 * (1.0 + jnp.tanh(0.7978845608028654 * (h1 + 0.044715 * h1 * h1 * h1)))
    w2t = p_ref[E + 3:E + 4, 0:Hd]                                   # (1, Hd) == w2^T
    b2 = p_ref[E + 4:E + 5, 0:1]                                     # (1, 1)
    logit = jnp.sum(g * w2t, axis=-1, keepdims=True) + b2            # (1, 1)
    prob = 1.0 / (1.0 + jnp.exp(-logit))                             # (1, 1)

    # Lane-dense output row (one unmasked store); wrapper reads lane 0.
    o_ref[...] = jnp.broadcast_to(prob.reshape(1, 1, 1), o_ref.shape)


def fuse_params(params):
    """One-time fusion of the 13 raw parameters into a single (E+5, 4E+Hd) slab.

    rows 0:E        lanes 0:3E      -> wqkv = [wq | wk | wv]
                    lanes 3E:4E     -> wo
                    lanes 4E:4E+Hd  -> w1
    row  E          lanes 0:3E      -> bqkv = [bq | bk | bv]
    row  E+1        lanes 0:E       -> bo
    row  E+2        lanes 0:Hd      -> b1
    row  E+3        lanes 0:Hd      -> w2^T
    row  E+4        lane  0         -> b2
    """
    E = params["wq"].shape[0]
    Hd = params["w1"].shape[1]
    E3 = 3 * E
    L = 4 * E + Hd
    slab = jnp.zeros((E + 5, L), jnp.float32)
    slab = slab.at[0:E, 0:E3].set(
        jnp.concatenate([params["wq"], params["wk"], params["wv"]], axis=1))
    slab = slab.at[0:E, E3:E3 + E].set(params["wo"])
    slab = slab.at[0:E, E3 + E:E3 + E + Hd].set(params["w1"])
    slab = slab.at[E, 0:E3].set(
        jnp.concatenate([params["bq"], params["bk"], params["bv"]], axis=1)[0])
    slab = slab.at[E + 1, 0:E].set(params["bo"][0])
    slab = slab.at[E + 2, 0:Hd].set(params["b1"][0])
    slab = slab.at[E + 3, 0:Hd].set(params["w2"][:, 0])
    slab = slab.at[E + 4, 0:1].set(params["b2"][0])
    return slab


@functools.partial(jax.jit, static_argnums=(2, 3))
def _forward_impl(xb, slab, num_heads, hidden_dim):
    """xb: (B, S, E) -> (B,) probabilities.  grid=(B,), weights resident in VMEM."""
    B, S, E = xb.shape
    kernel = functools.partial(_sttoper_kernel, num_heads, E, hidden_dim)
    out = pl.pallas_call(
        kernel,
        out_shape=jax.ShapeDtypeStruct((B, 1, 128), jnp.float32),
        grid=(B,),
        in_specs=[
            pl.BlockSpec((1, S, E), lambda b: (b, 0, 0)),        # per-sample block
            pl.BlockSpec(slab.shape, lambda b: (0, 0)),          # constant -> DMA'd once
        ],
        out_specs=pl.BlockSpec((1, 1, 128), lambda b: (b, 0, 0)),
        compiler_params=pltpu.CompilerParams(
            dimension_semantics=("parallel",)),                  # v7x: 2 TCs split batch
    )(xb.astype(jnp.float32), slab)
    return out[:, 0, 0]


def sttoper_forward(x, slab, num_heads, hidden_dim):
    """Single-sample forward matching SttoperNeuralModel.forward: (var1,var2,E) -> (1,)."""
    var1, var2, E = x.shape
    xb = x.reshape(1, var1 * var2, E)
    return _forward_impl(xb, slab, num_heads, hidden_dim)


def sttoper_batched_forward(xs, slab, num_heads, hidden_dim):
    """Throughput path: (B,var1,var2,E) -> (B,).  Same kernel, grid over samples."""
    B, var1, var2, E = xs.shape
    xb = xs.reshape(B, var1 * var2, E)
    return _forward_impl(xb, slab, num_heads, hidden_dim)


def init_params(key, input_dim, hidden_dim):
    ks = jax.random.split(key, 8)
    s = 0.05
    f = jnp.float32
    return {
        "wq": s * jax.random.normal(ks[0], (input_dim, input_dim), f),
        "bq": jnp.zeros((1, input_dim), f),
        "wk": s * jax.random.normal(ks[1], (input_dim, input_dim), f),
        "bk": jnp.zeros((1, input_dim), f),
        "wv": s * jax.random.normal(ks[2], (input_dim, input_dim), f),
        "bv": jnp.zeros((1, input_dim), f),
        "wo": s * jax.random.normal(ks[3], (input_dim, input_dim), f),
        "bo": s * jax.random.normal(ks[4], (1, input_dim), f),
        "w1": s * jax.random.normal(ks[5], (input_dim, hidden_dim), f),
        "b1": s * jax.random.normal(ks[6], (1, hidden_dim), f),
        "w2": s * jax.random.normal(ks[7], (hidden_dim, 1), f),
        "b2": jnp.zeros((1, 1), f),
    }


def reference_forward(x, params, num_heads):
    """Pure-JAX reference (PyTorch op order, HIGHEST precision matmuls)."""
    hp = jax.lax.Precision.HIGHEST
    var1, var2, E = x.shape
    S = var1 * var2
    dh = E // num_heads
    xx = x.reshape(S, E).astype(jnp.float32)
    q = jnp.dot(xx, params["wq"], precision=hp) + params["bq"]
    k = jnp.dot(xx, params["wk"], precision=hp) + params["bk"]
    v = jnp.dot(xx, params["wv"], precision=hp) + params["bv"]
    q3 = q.reshape(S, num_heads, dh) / jnp.sqrt(jnp.float32(dh))
    k3 = k.reshape(S, num_heads, dh)
    v3 = v.reshape(S, num_heads, dh)
    sc = jnp.einsum("qhd,khd->hqk", q3, k3, precision=hp)
    p = jax.nn.softmax(sc, axis=-1)
    ctx = jnp.einsum("hqk,khd->qhd", p, v3, precision=hp).reshape(S, E)
    attn_out = jnp.dot(ctx, params["wo"], precision=hp) + params["bo"]
    pooled = jnp.mean(attn_out, axis=0, keepdims=True)
    h1 = jnp.dot(pooled, params["w1"], precision=hp) + params["b1"]
    g = 0.5 * h1 * (1.0 + jnp.tanh(0.7978845608028654 * (h1 + 0.044715 * h1 ** 3)))
    logit = jnp.dot(g, params["w2"], precision=hp) + params["b2"]
    return jax.nn.sigmoid(logit).reshape(1)


if __name__ == "__main__":
    var1, var2 = 2, 8          # -> sequence length S = 16
    input_dim = 32             # embed dim (divisible by num_heads)
    hidden_dim = 32
    num_heads = 4

    key = jax.random.PRNGKey(0)
    kx, kp, kb = jax.random.split(key, 3)
    x = jax.random.normal(kx, (var1, var2, input_dim), jnp.float32)
    params = init_params(kp, input_dim, hidden_dim)
    slab = fuse_params(params)           # one-time packing into a single slab

    # Single-sample forward (module semantics): (var1, var2, E) -> (1,)
    out = jax.block_until_ready(sttoper_forward(x, slab, num_heads, hidden_dim))
    ref = jax.block_until_ready(reference_forward(x, params, num_heads))
    assert out.shape == (1,)
    # Tolerance deliberately relaxed vs the HIGHEST-precision reference: kernel
    # matmuls run at default MXU precision (per perf review, that drift is the
    # expected error source; estimated final error << 1e-4 at these dims).
    assert jnp.allclose(out, ref, atol=5e-4, rtol=5e-4), (out, ref)

    # Batched throughput path: grid=(B,), weights resident, parallel batch axis.
    B = 8
    xs = jax.random.normal(kb, (B, var1, var2, input_dim), jnp.float32)
    outb = jax.block_until_ready(
        sttoper_batched_forward(xs, slab, num_heads, hidden_dim))
    refb = jnp.stack([reference_forward(xs[i], params, num_heads)[0] for i in range(B)])
    assert outb.shape == (B,)
    assert jnp.allclose(outb, refb, atol=5e-4, rtol=5e-4), (outb, refb)

    print("KERNEL_OK")
</pallas_src>

<mosaic_0001>
module attributes {stable_mosaic.version = 11 : i64} {
  func.func @_sttoper_kernel(%arg0: i32, %arg1: memref<1x16x32xf32, #tpu.memory_space<vmem>>, %arg2: memref<37x160xf32, #tpu.memory_space<vmem>>, %arg3: memref<1x1x128xf32, #tpu.memory_space<vmem>>) attributes {dimension_semantics = [#tpu.dimension_semantics<parallel>], iteration_bounds = array<i64: 1>, scalar_prefetch = 0 : i64, scratch_operands = 0 : i64, tpu.core_type = #tpu.core_type<tc>, window_params = [{transform_indices = @transform_0, window_bounds = array<i64: 1, 16, 32>}, {pipeline_mode = #tpu.pipeline_mode<synchronous>, transform_indices = @transform_1, window_bounds = array<i64: 37, 160>}, {transform_indices = @transform_2, window_bounds = array<i64: 1, 1, 128>}]} {
    %c0 = arith.constant 0 : index
    %c0_0 = arith.constant 0 : index
    %c0_1 = arith.constant 0 : index
    %0 = vector.load %arg1[%c0, %c0_0, %c0_1] : memref<1x16x32xf32, #tpu.memory_space<vmem>>, vector<1x16x32xf32>
    %1 = vector.shape_cast %0 : vector<1x16x32xf32> to vector<16x32xf32>
    %c0_2 = arith.constant 0 : index
    %c0_3 = arith.constant 0 : index
    %2 = vector.load %arg2[%c0_2, %c0_3] : memref<37x160xf32, #tpu.memory_space<vmem>>, vector<32x96xf32>
    %c32 = arith.constant 32 : index
    %c0_4 = arith.constant 0 : index
    %3 = vector.load %arg2[%c32, %c0_4] : memref<37x160xf32, #tpu.memory_space<vmem>>, vector<1x96xf32>
    %cst = arith.constant dense<0.000000e+00> : vector<16x96xf32>
    %4 = tpu.matmul %1, %2, %cst {dimension_numbers = #tpu.dot_dimension_numbers<[1], [0], [0], [1], [0, 0, 1, 1], [], []>} : vector<16x32xf32>, vector<32x96xf32>, vector<16x96xf32> -> vector<16x96xf32>
    %5 = vector.broadcast %3 : vector<1x96xf32> to vector<16x96xf32>
    %6 = arith.addf %4, %5 : vector<16x96xf32>
    %7 = vector.extract_strided_slice %6 {offsets = [0, 0], sizes = [16, 32], strides = [1, 1]} : vector<16x96xf32> to vector<16x32xf32>
    %cst_5 = arith.constant 0.353553385 : f32
    %8 = vector.broadcast %cst_5 : f32 to vector<16x32xf32>
    %9 = arith.mulf %7, %8 : vector<16x32xf32>
    %10 = vector.extract_strided_slice %6 {offsets = [0, 32], sizes = [16, 32], strides = [1, 1]} : vector<16x96xf32> to vector<16x32xf32>
    %11 = vector.extract_strided_slice %6 {offsets = [0, 64], sizes = [16, 32], strides = [1, 1]} : vector<16x96xf32> to vector<16x32xf32>
    %12 = tpu.iota {dimensions = array<i32: 1>} : vector<1x32xi32>
    %c0_i32 = arith.constant 0 : i32
    %13 = vector.broadcast %c0_i32 : i32 to vector<1x32xi32>
    %14 = arith.cmpi sge, %12, %13 : vector<1x32xi32>
    %c8_i32 = arith.constant 8 : i32
    %15 = vector.broadcast %c8_i32 : i32 to vector<1x32xi32>
    %16 = arith.cmpi slt, %12, %15 : vector<1x32xi32>
    %17 = arith.andi %14, %16 : vector<1x32xi1>
    %18 = arith.extui %17 : vector<1x32xi1> to vector<1x32xi32>
    %19 = arith.sitofp %18 : vector<1x32xi32> to vector<1x32xf32>
    %20 = vector.broadcast %19 : vector<1x32xf32> to vector<16x32xf32>
    %21 = arith.mulf %9, %20 : vector<16x32xf32>
    %cst_6 = arith.constant dense<0.000000e+00> : vector<16x16xf32>
    %22 = tpu.matmul %21, %10, %cst_6 {dimension_numbers = #tpu.dot_dimension_numbers<[1], [1], [0], [0], [0, 0, 1, 0], [], []>} : vector<16x32xf32>, vector<16x32xf32>, vector<16x16xf32> -> vector<16x16xf32>
    %cst_7 = arith.constant dense<0xFF800000> : vector<16xf32>
    %23 = vector.multi_reduction <maximumf>, %22, %cst_7 [1] : vector<16x16xf32> to vector<16xf32>
    %24 = vector.shape_cast %23 : vector<16xf32> to vector<16x1xf32>
    %25 = vector.broadcast %24 : vector<16x1xf32> to vector<16x16xf32>
    %26 = arith.subf %22, %25 : vector<16x16xf32>
    %27 = math.exp %26 : vector<16x16xf32>
    %cst_8 = arith.constant dense<0.000000e+00> : vector<16xf32>
    %28 = vector.multi_reduction <add>, %27, %cst_8 [1] : vector<16x16xf32> to vector<16xf32>
    %29 = vector.shape_cast %28 : vector<16xf32> to vector<16x1xf32>
    %30 = vector.broadcast %29 : vector<16x1xf32> to vector<16x16xf32>
    %31 = arith.divf %27, %30 : vector<16x16xf32>
    %32 = vector.broadcast %19 : vector<1x32xf32> to vector<16x32xf32>
    %33 = arith.mulf %11, %32 : vector<16x32xf32>
    %c8_i32_9 = arith.constant 8 : i32
    %34 = vector.broadcast %c8_i32_9 : i32 to vector<1x32xi32>
    %35 = arith.cmpi sge, %12, %34 : vector<1x32xi32>
    %c16_i32 = arith.constant 16 : i32
    %36 = vector.broadcast %c16_i32 : i32 to vector<1x32xi32>
    %37 = arith.cmpi slt, %12, %36 : vector<1x32xi32>
    %38 = arith.andi %35, %37 : vector<1x32xi1>
    %39 = arith.extui %38 : vector<1x32xi1> to vector<1x32xi32>
    %40 = arith.sitofp %39 : vector<1x32xi32> to vector<1x32xf32>
    %41 = vector.broadcast %40 : vector<1x32xf32> to vector<16x32xf32>
    %42 = arith.mulf %9, %41 : vector<16x32xf32>
    %cst_10 = arith.constant dense<0.000000e+00> : vector<16x16xf32>
    %43 = tpu.matmul %42, %10, %cst_10 {dimension_numbers = #tpu.dot_dimension_numbers<[1], [1], [0], [0], [0, 0, 1, 0], [], []>} : vector<16x32xf32>, vector<16x32xf32>, vector<16x16xf32> -> vector<16x16xf32>
    %cst_11 = arith.constant dense<0xFF800000> : vector<16xf32>
    %44 = vector.multi_reduction <maximumf>, %43, %cst_11 [1] : vector<16x16xf32> to vector<16xf32>
    %45 = vector.shape_cast %44 : vector<16xf32> to vector<16x1xf32>
    %46 = vector.broadcast %45 : vector<16x1xf32> to vector<16x16xf32>
    %47 = arith.subf %43, %46 : vector<16x16xf32>
    %48 = math.exp %47 : vector<16x16xf32>
    %cst_12 = arith.constant dense<0.000000e+00> : vector<16xf32>
    %49 = vector.multi_reduction <add>, %48, %cst_12 [1] : vector<16x16xf32> to vector<16xf32>
    %50 = vector.shape_cast %49 : vector<16xf32> to vector<16x1xf32>
    %51 = vector.broadcast %50 : vector<16x1xf32> to vector<16x16xf32>
    %52 = arith.divf %48, %51 : vector<16x16xf32>
    %53 = vector.broadcast %40 : vector<1x32xf32> to vector<16x32xf32>
    %54 = arith.mulf %11, %53 : vector<16x32xf32>
    %c16_i32_13 = arith.constant 16 : i32
    %55 = vector.broadcast %c16_i32_13 : i32 to vector<1x32xi32>
    %56 = arith.cmpi sge, %12, %55 : vector<1x32xi32>
    %c24_i32 = arith.constant 24 : i32
    %57 = vector.broadcast %c24_i32 : i32 to vector<1x32xi32>
    %58 = arith.cmpi slt, %12, %57 : vector<1x32xi32>
    %59 = arith.andi %56, %58 : vector<1x32xi1>
    %60 = arith.extui %59 : vector<1x32xi1> to vector<1x32xi32>
    %61 = arith.sitofp %60 : vector<1x32xi32> to vector<1x32xf32>
    %62 = vector.broadcast %61 : vector<1x32xf32> to vector<16x32xf32>
    %63 = arith.mulf %9, %62 : vector<16x32xf32>
    %cst_14 = arith.constant dense<0.000000e+00> : vector<16x16xf32>
    %64 = tpu.matmul %63, %10, %cst_14 {dimension_numbers = #tpu.dot_dimension_numbers<[1], [1], [0], [0], [0, 0, 1, 0], [], []>} : vector<16x32xf32>, vector<16x32xf32>, vector<16x16xf32> -> vector<16x16xf32>
    %cst_15 = arith.constant dense<0xFF800000> : vector<16xf32>
    %65 = vector.multi_reduction <maximumf>, %64, %cst_15 [1] : vector<16x16xf32> to vector<16xf32>
    %66 = vector.shape_cast %65 : vector<16xf32> to vector<16x1xf32>
    %67 = vector.broadcast %66 : vector<16x1xf32> to vector<16x16xf32>
    %68 = arith.subf %64, %67 : vector<16x16xf32>
    %69 = math.exp %68 : vector<16x16xf32>
    %cst_16 = arith.constant dense<0.000000e+00> : vector<16xf32>
    %70 = vector.multi_reduction <add>, %69, %cst_16 [1] : vector<16x16xf32> to vector<16xf32>
    %71 = vector.shape_cast %70 : vector<16xf32> to vector<16x1xf32>
    %72 = vector.broadcast %71 : vector<16x1xf32> to vector<16x16xf32>
    %73 = arith.divf %69, %72 : vector<16x16xf32>
    %74 = vector.broadcast %61 : vector<1x32xf32> to vector<16x32xf32>
    %75 = arith.mulf %11, %74 : vector<16x32xf32>
    %c24_i32_17 = arith.constant 24 : i32
    %76 = vector.broadcast %c24_i32_17 : i32 to vector<1x32xi32>
    %77 = arith.cmpi sge, %12, %76 : vector<1x32xi32>
    %c32_i32 = arith.constant 32 : i32
    %78 = vector.broadcast %c32_i32 : i32 to vector<1x32xi32>
    %79 = arith.cmpi slt, %12, %78 : vector<1x32xi32>
    %80 = arith.andi %77, %79 : vector<1x32xi1>
    %81 = arith.extui %80 : vector<1x32xi1> to vector<1x32xi32>
    %82 = arith.sitofp %81 : vector<1x32xi32> to vector<1x32xf32>
    %83 = vector.broadcast %82 : vector<1x32xf32> to vector<16x32xf32>
    %84 = arith.mulf %9, %83 : vector<16x32xf32>
    %cst_18 = arith.constant dense<0.000000e+00> : vector<16x16xf32>
    %85 = tpu.matmul %84, %10, %cst_18 {dimension_numbers = #tpu.dot_dimension_numbers<[1], [1], [0], [0], [0, 0, 1, 0], [], []>} : vector<16x32xf32>, vector<16x32xf32>, vector<16x16xf32> -> vector<16x16xf32>
    %cst_19 = arith.constant dense<0xFF800000> : vector<16xf32>
    %86 = vector.multi_reduction <maximumf>, %85, %cst_19 [1] : vector<16x16xf32> to vector<16xf32>
    %87 = vector.shape_cast %86 : vector<16xf32> to vector<16x1xf32>
    %88 = vector.broadcast %87 : vector<16x1xf32> to vector<16x16xf32>
    %89 = arith.subf %85, %88 : vector<16x16xf32>
    %90 = math.exp %89 : vector<16x16xf32>
    %cst_20 = arith.constant dense<0.000000e+00> : vector<16xf32>
    %91 = vector.multi_reduction <add>, %90, %cst_20 [1] : vector<16x16xf32> to vector<16xf32>
    %92 = vector.shape_cast %91 : vector<16xf32> to vector<16x1xf32>
    %93 = vector.broadcast %92 : vector<16x1xf32> to vector<16x16xf32>
    %94 = arith.divf %90, %93 : vector<16x16xf32>
    %95 = vector.broadcast %82 : vector<1x32xf32> to vector<16x32xf32>
    %96 = arith.mulf %11, %95 : vector<16x32xf32>
    %97 = tpu.concatenate %31, %52, %73, %94 in 1 : vector<16x16xf32>, vector<16x16xf32>, vector<16x16xf32>, vector<16x16xf32> -> vector<16x64xf32>
    %98 = tpu.concatenate %33, %54, %75, %96 in 0 : vector<16x32xf32>, vector<16x32xf32>, vector<16x32xf32>, vector<16x32xf32> -> vector<64x32xf32>
    %cst_21 = arith.constant dense<0.000000e+00> : vector<16x32xf32>
    %99 = tpu.matmul %97, %98, %cst_21 {dimension_numbers = #tpu.dot_dimension_numbers<[1], [0], [0], [1], [0, 0, 1, 1], [], []>} : vector<16x64xf32>, vector<64x32xf32>, vector<16x32xf32> -> vector<16x32xf32>
    %cst_22 = arith.constant 6.250000e-02 : f32
    %100 = vector.broadcast %cst_22 : f32 to vector<1x16xf32>
    %cst_23 = arith.constant dense<0.000000e+00> : vector<1x32xf32>
    %101 = tpu.matmul %100, %99, %cst_23 {dimension_numbers = #tpu.dot_dimension_numbers<[1], [0], [0], [1], [0, 0, 1, 1], [], []>} : vector<1x16xf32>, vector<16x32xf32>, vector<1x32xf32> -> vector<1x32xf32>
    %c0_24 = arith.constant 0 : index
    %c96 = arith.constant 96 : index
    %102 = vector.load %arg2[%c0_24, %c96] : memref<37x160xf32, #tpu.memory_space<vmem>>, vector<32x32xf32>
    %c33 = arith.constant 33 : index
    %c0_25 = arith.constant 0 : index
    %103 = vector.load %arg2[%c33, %c0_25] : memref<37x160xf32, #tpu.memory_space<vmem>>, vector<1x32xf32>
    %cst_26 = arith.constant dense<0.000000e+00> : vector<1x32xf32>
    %104 = tpu.matmul %101, %102, %cst_26 {dimension_numbers = #tpu.dot_dimension_numbers<[1], [0], [0], [1], [0, 0, 1, 1], [], []>} : vector<1x32xf32>, vector<32x32xf32>, vector<1x32xf32> -> vector<1x32xf32>
    %105 = arith.addf %104, %103 : vector<1x32xf32>
    %c0_27 = arith.constant 0 : index
    %c128 = arith.constant 128 : index
    %106 = vector.load %arg2[%c0_27, %c128] : memref<37x160xf32, #tpu.memory_space<vmem>>, vector<32x32xf32>
    %c34 = arith.constant 34 : index
    %c0_28 = arith.constant 0 : index
    %107 = vector.load %arg2[%c34, %c0_28] : memref<37x160xf32, #tpu.memory_space<vmem>>, vector<1x32xf32>
    %cst_29 = arith.constant dense<0.000000e+00> : vector<1x32xf32>
    %108 = tpu.matmul %105, %106, %cst_29 {dimension_numbers = #tpu.dot_dimension_numbers<[1], [0], [0], [1], [0, 0, 1, 1], [], []>} : vector<1x32xf32>, vector<32x32xf32>, vector<1x32xf32> -> vector<1x32xf32>
    %109 = arith.addf %108, %107 : vector<1x32xf32>
    %cst_30 = arith.constant 5.000000e-01 : f32
    %110 = vector.broadcast %cst_30 : f32 to vector<1x32xf32>
    %111 = arith.mulf %110, %109 : vector<1x32xf32>
    %cst_31 = arith.constant 4.471500e-02 : f32
    %112 = vector.broadcast %cst_31 : f32 to vector<1x32xf32>
    %113 = arith.mulf %112, %109 : vector<1x32xf32>
    %114 = arith.mulf %113, %109 : vector<1x32xf32>
    %115 = arith.mulf %114, %109 : vector<1x32xf32>
    %116 = arith.addf %109, %115 : vector<1x32xf32>
    %cst_32 = arith.constant 0.797884583 : f32
    %117 = vector.broadcast %cst_32 : f32 to vector<1x32xf32>
    %118 = arith.mulf %117, %116 : vector<1x32xf32>
    %119 = math.tanh %118 : vector<1x32xf32>
    %cst_33 = arith.constant 1.000000e+00 : f32
    %120 = vector.broadcast %cst_33 : f32 to vector<1x32xf32>
    %121 = arith.addf %120, %119 : vector<1x32xf32>
    %122 = arith.mulf %111, %121 : vector<1x32xf32>
    %c35 = arith.constant 35 : index
    %c0_34 = arith.constant 0 : index
    %123 = vector.load %arg2[%c35, %c0_34] : memref<37x160xf32, #tpu.memory_space<vmem>>, vector<1x32xf32>
    %c36 = arith.constant 36 : index
    %c0_35 = arith.constant 0 : index
    %124 = vector.load %arg2[%c36, %c0_35] : memref<37x160xf32, #tpu.memory_space<vmem>>, vector<1x1xf32>
    %125 = arith.mulf %122, %123 : vector<1x32xf32>
    %cst_36 = arith.constant dense<0.000000e+00> : vector<1xf32>
    %126 = vector.multi_reduction <add>, %125, %cst_36 [1] : vector<1x32xf32> to vector<1xf32>
    %127 = vector.shape_cast %126 : vector<1xf32> to vector<1x1xf32>
    %128 = arith.addf %127, %124 : vector<1x1xf32>
    %cst_37 = arith.constant 0.000000e+00 : f32
    %129 = vector.broadcast %cst_37 : f32 to vector<1x1xf32>
    %130 = arith.subf %129, %128 : vector<1x1xf32>
    %131 = math.exp %130 : vector<1x1xf32>
    %cst_38 = arith.constant 1.000000e+00 : f32
    %132 = vector.broadcast %cst_38 : f32 to vector<1x1xf32>
    %133 = arith.addf %132, %131 : vector<1x1xf32>
    %cst_39 = arith.constant 1.000000e+00 : f32
    %134 = vector.broadcast %cst_39 : f32 to vector<1x1xf32>
    %135 = arith.divf %134, %133 : vector<1x1xf32>
    %136 = vector.shape_cast %135 : vector<1x1xf32> to vector<1x1x1xf32>
    %137 = vector.shape_cast %136 : vector<1x1x1xf32> to vector<1x1x1xf32>
    %138 = vector.broadcast %137 : vector<1x1x1xf32> to vector<1x1x128xf32>
    %c0_40 = arith.constant 0 : index
    %c0_41 = arith.constant 0 : index
    %c0_42 = arith.constant 0 : index
    %139 = vector.load %arg3[%c0_40, %c0_41, %c0_42] : memref<1x1x128xf32, #tpu.memory_space<vmem>>, vector<1x1x128xf32>
    tpu.vector_store %arg3[%c0_40, %c0_41, %c0_42], %138 {strides = array<i32>} : memref<1x1x128xf32, #tpu.memory_space<vmem>>, vector<1x1x128xf32>,
    return
  }
  func.func @transform_0(%arg0: i32) -> (i32, i32, i32) {
    %c0_i32 = arith.constant 0 : i32
    %c0_i32_0 = arith.constant 0 : i32
    %c0_i32_1 = arith.constant 0 : i32
    return %arg0, %c0_i32, %c0_i32_0 : i32, i32, i32
  }
  func.func @transform_1(%arg0: i32) -> (i32, i32) {
    %c0_i32 = arith.constant 0 : i32
    %c0_i32_0 = arith.constant 0 : i32
    %c0_i32_1 = arith.constant 0 : i32
    return %c0_i32, %c0_i32_0 : i32, i32
  }
  func.func @transform_2(%arg0: i32) -> (i32, i32, i32) {
    %c0_i32 = arith.constant 0 : i32
    %c0_i32_0 = arith.constant 0 : i32
    %c0_i32_1 = arith.constant 0 : i32
    return %arg0, %c0_i32, %c0_i32_0 : i32, i32, i32
  }
}

</mosaic_0001>

<llo_original>
// kernel: _forward_impl.1
$region0: #{_forward_impl.1}
  #allocation0 [shape = 'u32[]', space=smem, size = 0x4, offset = 0x4, fixed_abs, tag = 'smem constant byte address 0x4 - core index']
  #allocation1 [shape = 'u32[144,128]{1,0:T(1,128)}', space=vmem, size = 0x12000, scoped, tag = 'internal scratch']
  %s0 = inlined_call_operand.hbm [shape: f32[1,16,32], index: 0, kind: input, shape index: {}]
  %s1 = inlined_call_operand.hbm [shape: f32[37,160], index: 1, kind: input, shape index: {}]
  %s2 = inlined_call_operand.hbm [shape: f32[1,1,128], index: 2, kind: output, shape index: {}]
  %s3 = sld [smem:[#allocation0]]
  $region26: #{_forward_impl.1} parent=0
    _
  %s5 = ssub.s32 1, %s3
  %s6 = scalar_select 0, %s5, %s3
  $region1: #{_forward_impl.1} parent=0
    #allocation2 [shape = 'u8[8192]{0}', space=vmem, size = 0x2000, scoped, tag = 'input window, operand 0, single buffered']
    #allocation3 [shape = 's32[1]{0}', space=sflag, size = 0x4, scoped, tag = 'scoped memory for _forward_impl.1']
    #allocation4 [shape = 's32[1]{0}', space=sflag, size = 0x4, scoped, tag = 'scoped memory for _forward_impl.1']
    #allocation5 [shape = 'u8[40960]{0}', space=vmem, size = 0xa000, scoped, tag = 'input window, operand 1, single buffered']
    #allocation6 [shape = 's32[1]{0}', space=sflag, size = 0x4, scoped, tag = 'scoped memory for _forward_impl.1']
    #allocation7 [shape = 'u8[512]{0}', space=vmem, size = 0x400, scoped, tag = 'output window, operand 0, single buffered']
    %7 = vsyncpa [#allocation3], 0
    %8 = vsyncpa [#allocation6], 0
    %9 = vsyncpa [#allocation4], 0
    // Predicated region
    $region2: #{_forward_impl.1} parent=1 // pred_check
      _
    $region3: #{_forward_impl.1} parent=1 // pred_check_branch
      %11 = sbr.rel (0) target = $region5
    $region4: #{_forward_impl.1} parent=1 // pred_region
      %s13 = ssub.s32 256, 256
      %14 = vsyncadd [#allocation3], %s13
      %s15 = sshll.u32 [#allocation2], 4
      %s16 = int_to_ptr.vmem [resolvable:$true] %s15
      %21 = dma.hbm_to_vmem [thread:$0]  %s0, 256, %s16, [#allocation3], 128, 128, 8
    $region5: #{_forward_impl.1} parent=1 // pred_fallthru
      _
    // Predicated region
    $region6: #{_forward_impl.1} parent=1 // pred_check
      _
    $region7: #{_forward_impl.1} parent=1 // pred_check_branch
      %23 = sbr.rel (0) target = $region9
    $region8: #{_forward_impl.1} parent=1 // pred_region
      %s25 = ssub.s32 1280, 1280
      %26 = vsyncadd [#allocation6], %s25
      %s27 = sshll.u32 [#allocation5], 4
      %s28 = int_to_ptr.vmem [resolvable:$true] %s27
      %33 = dma.hbm_to_vmem [thread:$0]  %s1, 1280, %s28, [#allocation6], 256, 256, 16
    $region9: #{_forward_impl.1} parent=1 // pred_fallthru
      _
    // Predicated region
    $region10: #{_forward_impl.1} parent=1 // pred_check
      _
    $region11: #{_forward_impl.1} parent=1 // pred_check_branch
      %35 = sbr.rel (0) target = $region13
    $region12: #{_forward_impl.1} parent=1 // pred_region
      %36 = dma.done [#allocation3], 256
    $region13: #{_forward_impl.1} parent=1 // pred_fallthru
      _
    // Predicated region
    $region14: #{_forward_impl.1} parent=1 // pred_check
      _
    $region15: #{_forward_impl.1} parent=1 // pred_check_branch
      %38 = sbr.rel (0) target = $region17
    $region16: #{_forward_impl.1} parent=1 // pred_region
      %39 = dma.done [#allocation6], 1280
    $region17: #{_forward_impl.1} parent=1 // pred_fallthru
      _
    %v40 = vld [vmem:[#allocation2] sm:$0xff]
    %v41 = vld [vmem:[#allocation2 + $0x8] sm:$0xff]
    %v42 = vld [vmem:[#allocation5] sm:$0xff]
    %v43 = vld [vmem:[#allocation5 + $0x10] sm:$0xff]
    %v44 = vld [vmem:[#allocation5 + $0x20] sm:$0xff]
    %v45 = vld [vmem:[#allocation5 + $0x30] sm:$0xff]
    %v46 = vld [vmem:[#allocation5 + $0x40] ss:$0 sm:$0xff]
    %vm47 = vcmask 261120
    %v49 = vsel %vm47, %v40, 0
    %v52 = vsel %vm47, %v41, 0
    %54 = vmatprep.subr.mxu0 0.0
    %55 = vmatpush1.msra.mxu0 0.0
    %56 = vmatprep.subr.mxu0 0.0
    %57 = vmatpush1.msra.mxu0 0.0
    %58 = vmatprep.subr.mxu0 0.0
    %59 = vmatpush1.msra.mxu0 0.0
    %60 = vmatprep.subr.mxu0 0.0
    %61 = vmatpush1.msra.mxu0 0.0
    %62 = vmatprep.subr.mxu0 0.0
    %63 = vmatpush1.msra.mxu0 0.0
    %64 = vmatprep.subr.mxu0 0.0
    %65 = vmatpush1.msra.mxu0 0.0
    %66 = vmatprep.subr.mxu0 0.0
    %67 = vmatpush1.msra.mxu0 0.0
    %68 = vmatprep.subr.mxu0 0.0
    %69 = vmatpush1.msra.mxu0 0.0
    %70 = vmatprep.subr.mxu0 0.0
    %71 = vmatpush1.msra.mxu0 0.0
    %72 = vmatprep.subr.mxu0 0.0
    %73 = vmatpush1.msra.mxu0 0.0
    %74 = vmatprep.subr.mxu0 0.0
    %75 = vmatpush1.msra.mxu0 0.0
    %76 = vmatprep.subr.mxu0 0.0
    %77 = vmatpush1.msra.mxu0 0.0
    %78 = vmatprep.subr.mxu0 0.0
    %79 = vmatpush1.msra.mxu0 %v45
    %80 = vmatprep.subr.mxu0 0.0
    %81 = vmatpush1.msra.mxu0 %v44
    %82 = vmatprep.subr.mxu0 0.0
    %83 = vmatpush1.msra.mxu0 %v43
    %84 = vmatprep.subr.mxu0 0.0
    %85 = vmatpush1.msra.mxu0 %v42
    %86 = vmatprep.subr.mxu0 0.0
    %87 = vmatpush2.msra.mxu0 0.0
    %88 = vmatprep.subr.mxu0 0.0
    %89 = vmatpush2.msra.mxu0 0.0
    %90 = vmatprep.subr.mxu0 0.0
    %91 = vmatpush2.msra.mxu0 0.0
    %92 = vmatprep.subr.mxu0 0.0
    %93 = vmatpush2.msra.mxu0 0.0
    %94 = vmatprep.subr.mxu0 0.0
    %95 = vmatpush2.msra.mxu0 0.0
    %96 = vmatprep.subr.mxu0 0.0
    %97 = vmatpush2.msra.mxu0 0.0
    %98 = vmatprep.subr.mxu0 0.0
    %99 = vmatpush2.msra.mxu0 0.0
    %100 = vmatprep.subr.mxu0 0.0
    %101 = vmatpush2.msra.mxu0 0.0
    %102 = vmatprep.subr.mxu0 0.0
    %103 = vmatpush2.msra.mxu0 0.0
    %104 = vmatprep.subr.mxu0 0.0
    %105 = vmatpush2.msra.mxu0 0.0
    %106 = vmatprep.subr.mxu0 0.0
    %107 = vmatpush2.msra.mxu0 0.0
    %108 = vmatprep.subr.mxu0 0.0
    %109 = vmatpush2.msra.mxu0 0.0
    %110 = vmatprep.subr.mxu0 0.0
    %111 = vmatpush2.msra.mxu0 0.0
    %112 = vmatprep.subr.mxu0 0.0
    %113 = vmatpush2.msra.mxu0 0.0
    %114 = vmatprep.subr.mxu0 0.0
    %115 = vmatpush2.msra.mxu0 0.0
    %116 = vmatprep.subr.mxu0 0.0
    %117 = vmatpush2.msra.mxu0 0.0
    %118 = vmatprep.mubr.f32.mxu0 0.0
    %119 = vmatmul.mubr.f32.gmra.mxu0 %v49
    %v120 = vpop.f32.mrf.mxu0
    %v121 = vadd.f32 %v46, %v120
    %v122 = vpop.f32.mrf.mxu0
    %123 = vmatprep.mubr.f32.mxu0 0.0
    %124 = vmatmul.mubr.f32.gmra.mxu0 %v52
    %v125 = vpop.f32.mrf.mxu0
    %v126 = vadd.f32 %v46, %v125
    %v127 = vpop.f32.mrf.mxu0
    %128 = vdwg.mxu0
    %v129 = vmul.f32 %v121, 0.35355338
    %v130 = vmul.f32 %v126, 0.35355338
    %v131 = vlaneseq
    %v132 = vand.u32 %v131, 127
    %vm133 = vcmp.ge.s32.totalorder %v132, 0
    %vm134 = vcmp.lt.s32.totalorder %v132, 8
    %vm135 = vmand %vm133, %vm134
    %v136 = vsel %vm135, 1, 0
    %v137 = vcvt.s32.f32 %v136
    %v138 = vmul.f32 %v129, %v137
    %v139 = vmul.f32 %v130, %v137
    %142 = vrot.lane.b32.xlu0 %v121, 96
    %v143 = vpop.permute.xlu0 %142
    %144 = vrot.lane.b32.xlu0 %v126, 96
    %v145 = vpop.permute.xlu0 %144
    %v147 = vsel %vm47, %v138, 0
    %v150 = vsel %vm47, %v139, 0
    %v152 = vsel %vm47, %v143, 0
    %v154 = vsel %vm47, %v145, 0
    %156 = vmatprep.subr.mxu0 0.0
    %157 = vmatpush1.xpose.msra.mxu0 0.0
    %158 = vmatprep.subr.mxu0 0.0
    %159 = vmatpush1.xpose.msra.mxu0 0.0
    %160 = vmatprep.subr.mxu0 0.0
    %161 = vmatpush1.xpose.msra.mxu0 0.0
    %162 = vmatprep.subr.mxu0 0.0
    %163 = vmatpush1.xpose.msra.mxu0 0.0
    %164 = vmatprep.subr.mxu0 0.0
    %165 = vmatpush1.xpose.msra.mxu0 0.0
    %166 = vmatprep.subr.mxu0 0.0
    %167 = vmatpush1.xpose.msra.mxu0 0.0
    %168 = vmatprep.subr.mxu0 0.0
    %169 = vmatpush1.xpose.msra.mxu0 0.0
    %170 = vmatprep.subr.mxu0 0.0
    %171 = vmatpush1.xpose.msra.mxu0 0.0
    %172 = vmatprep.subr.mxu0 0.0
    %173 = vmatpush1.xpose.msra.mxu0 0.0
    %174 = vmatprep.subr.mxu0 0.0
    %175 = vmatpush1.xpose.msra.mxu0 0.0
    %176 = vmatprep.subr.mxu0 0.0
    %177 = vmatpush1.xpose.msra.mxu0 0.0
    %178 = vmatprep.subr.mxu0 0.0
    %179 = vmatpush1.xpose.msra.mxu0 0.0
    %180 = vmatprep.subr.mxu0 0.0
    %181 = vmatpush1.xpose.msra.mxu0 0.0
    %182 = vmatprep.subr.mxu0 0.0
    %183 = vmatpush1.xpose.msra.mxu0 0.0
    %184 = vmatprep.subr.mxu0 0.0
    %185 = vmatpush1.xpose.msra.mxu0 %v154
    %186 = vmatprep.subr.mxu0 0.0
    %187 = vmatpush1.xpose.msra.mxu0 %v152
    %188 = vmatprep.subr.mxu0 0.0
    %189 = vmatpush2.xpose.msra.mxu0 0.0
    %190 = vmatprep.subr.mxu0 0.0
    %191 = vmatpush2.xpose.msra.mxu0 0.0
    %192 = vmatprep.subr.mxu0 0.0
    %193 = vmatpush2.xpose.msra.mxu0 0.0
    %194 = vmatprep.subr.mxu0 0.0
    %195 = vmatpush2.xpose.msra.mxu0 0.0
    %196 = vmatprep.subr.mxu0 0.0
    %197 = vmatpush2.xpose.msra.mxu0 0.0
    %198 = vmatprep.subr.mxu0 0.0
    %199 = vmatpush2.xpose.msra.mxu0 0.0
    %200 = vmatprep.subr.mxu0 0.0
    %201 = vmatpush2.xpose.msra.mxu0 0.0
    %202 = vmatprep.subr.mxu0 0.0
    %203 = vmatpush2.xpose.msra.mxu0 0.0
    %204 = vmatprep.subr.mxu0 0.0
    %205 = vmatpush2.xpose.msra.mxu0 0.0
    %206 = vmatprep.subr.mxu0 0.0
    %207 = vmatpush2.xpose.msra.mxu0 0.0
    %208 = vmatprep.subr.mxu0 0.0
    %209 = vmatpush2.xpose.msra.mxu0 0.0
    %210 = vmatprep.subr.mxu0 0.0
    %211 = vmatpush2.xpose.msra.mxu0 0.0
    %212 = vmatprep.subr.mxu0 0.0
    %213 = vmatpush2.xpose.msra.mxu0 0.0
    %214 = vmatprep.subr.mxu0 0.0
    %215 = vmatpush2.xpose.msra.mxu0 0.0
    %216 = vmatprep.subr.mxu0 0.0
    %217 = vmatpush2.xpose.msra.mxu0 0.0
    %218 = vmatprep.subr.mxu0 0.0
    %219 = vmatpush2.xpose.msra.mxu0 0.0
    %220 = vmatprep.mubr.f32.mxu0 0.0
    %221 = vmatmul.mubr.f32.gmra.mxu0 %v147
    %v222 = vpop.f32.mrf.mxu0
    %v223 = vadd.f32 0.0, %v222
    %v224 = vpop.f32.mrf.mxu0
    %225 = vmatprep.mubr.f32.mxu0 0.0
    %226 = vmatmul.mubr.f32.gmra.mxu0 %v150
    %v227 = vpop.f32.mrf.mxu0
    %v228 = vadd.f32 0.0, %v227
    %v229 = vpop.f32.mrf.mxu0
    %230 = vdwg.mxu0
    %vm231 = vcmask 130048
    %v232 = vsel %vm231, %v223, -inf
    %233 = vmax.xlane.f32.xlu0 %v232
    %v234 = vpop.xlane.xlu0 %233
    %v235 = vsel %vm231, %v228, -inf
    %236 = vmax.xlane.f32.xlu0 %v235
    %v237 = vpop.xlane.xlu0 %236
    %v238 = vsub.f32 %v223, %v234
    %v239 = vsub.f32 %v228, %v237
    %v240 = vmul.f32 %v238, 1.442695
    %v241 = vpow.pop %v240
    %v242 = vmul.f32 %v239, 1.442695
    %v243 = vpow.pop %v242
    %v244 = vsel %vm231, %v241, 0.0
    %245 = vadd.xlane.f32.xlu0 %v244
    %v246 = vpop.xlane.xlu0 %245
    %v247 = vsel %vm231, %v243, 0.0
    %248 = vadd.xlane.f32.xlu0 %v247
    %v249 = vpop.xlane.xlu0 %248
    %v250 = vrcp.pop %v246
    %v251 = vmul.f32 %v241, %v250
    %v252 = vrcp.pop %v249
    %v253 = vmul.f32 %v243, %v252
    %255 = vrot.lane.b32.xlu0 %v137, 64
    %v256 = vpop.permute.xlu0 %255
    %v258 = vmul.f32 %v121, %v256
    %v259 = vmul.f32 %v126, %v256
    %vm260 = vcmp.ge.s32.totalorder %v132, 8
    %vm261 = vcmp.lt.s32.totalorder %v132, 16
    %vm262 = vmand %vm260, %vm261
    %v263 = vsel %vm262, 1, 0
    %v264 = vcvt.s32.f32 %v263
    %v265 = vmul.f32 %v129, %v264
    %v266 = vmul.f32 %v130, %v264
    %v268 = vsel %vm47, %v265, 0
    %v271 = vsel %vm47, %v266, 0
    %273 = vmatprep.subr.mxu0 0.0
    %274 = vmatpush1.xpose.msra.mxu0 0.0
    %275 = vmatprep.subr.mxu0 0.0
    %276 = vmatpush1.xpose.msra.mxu0 0.0
    %277 = vmatprep.subr.mxu0 0.0
    %278 = vmatpush1.xpose.msra.mxu0 0.0
    %279 = vmatprep.subr.mxu0 0.0
    %280 = vmatpush1.xpose.msra.mxu0 0.0
    %281 = vmatprep.subr.mxu0 0.0
    %282 = vmatpush1.xpose.msra.mxu0 0.0
    %283 = vmatprep.subr.mxu0 0.0
    %284 = vmatpush1.xpose.msra.mxu0 0.0
    %285 = vmatprep.subr.mxu0 0.0
    %286 = vmatpush1.xpose.msra.mxu0 0.0
    %287 = vmatprep.subr.mxu0 0.0
    %288 = vmatpush1.xpose.msra.mxu0 0.0
    %289 = vmatprep.subr.mxu0 0.0
    %290 = vmatpush1.xpose.msra.mxu0 0.0
    %291 = vmatprep.subr.mxu0 0.0
    %292 = vmatpush1.xpose.msra.mxu0 0.0
    %293 = vmatprep.subr.mxu0 0.0
    %294 = vmatpush1.xpose.msra.mxu0 0.0
    %295 = vmatprep.subr.mxu0 0.0
    %296 = vmatpush1.xpose.msra.mxu0 0.0
    %297 = vmatprep.subr.mxu0 0.0
    %298 = vmatpush1.xpose.msra.mxu0 0.0
    %299 = vmatprep.subr.mxu0 0.0
    %300 = vmatpush1.xpose.msra.mxu0 0.0
    %301 = vmatprep.subr.mxu0 0.0
    %302 = vmatpush1.xpose.msra.mxu0 %v154
    %303 = vmatprep.subr.mxu0 0.0
    %304 = vmatpush1.xpose.msra.mxu0 %v152
    %305 = vmatprep.subr.mxu0 0.0
    %306 = vmatpush2.xpose.msra.mxu0 0.0
    %307 = vmatprep.subr.mxu0 0.0
    %308 = vmatpush2.xpose.msra.mxu0 0.0
    %309 = vmatprep.subr.mxu0 0.0
    %310 = vmatpush2.xpose.msra.mxu0 0.0
    %311 = vmatprep.subr.mxu0 0.0
    %312 = vmatpush2.xpose.msra.mxu0 0.0
    %313 = vmatprep.subr.mxu0 0.0
    %314 = vmatpush2.xpose.msra.mxu0 0.0
    %315 = vmatprep.subr.mxu0 0.0
    %316 = vmatpush2.xpose.msra.mxu0 0.0
    %317 = vmatprep.subr.mxu0 0.0
    %318 = vmatpush2.xpose.msra.mxu0 0.0
    %319 = vmatprep.subr.mxu0 0.0
    %320 = vmatpush2.xpose.msra.mxu0 0.0
    %321 = vmatprep.subr.mxu0 0.0
    %322 = vmatpush2.xpose.msra.mxu0 0.0
    %323 = vmatprep.subr.mxu0 0.0
    %324 = vmatpush2.xpose.msra.mxu0 0.0
    %325 = vmatprep.subr.mxu0 0.0
    %326 = vmatpush2.xpose.msra.mxu0 0.0
    %327 = vmatprep.subr.mxu0 0.0
    %328 = vmatpush2.xpose.msra.mxu0 0.0
    %329 = vmatprep.subr.mxu0 0.0
    %330 = vmatpush2.xpose.msra.mxu0 0.0
    %331 = vmatprep.subr.mxu0 0.0
    %332 = vmatpush2.xpose.msra.mxu0 0.0
    %333 = vmatprep.subr.mxu0 0.0
    %334 = vmatpush2.xpose.msra.mxu0 0.0
    %335 = vmatprep.subr.mxu0 0.0
    %336 = vmatpush2.xpose.msra.mxu0 0.0
    %337 = vmatprep.mubr.f32.mxu0 0.0
    %338 = vmatmul.mubr.f32.gmra.mxu0 %v268
    %v339 = vpop.f32.mrf.mxu0
    %v340 = vadd.f32 0.0, %v339
    %v341 = vpop.f32.mrf.mxu0
    %342 = vmatprep.mubr.f32.mxu0 0.0
    %343 = vmatmul.mubr.f32.gmra.mxu0 %v271
    %v344 = vpop.f32.mrf.mxu0
    %v345 = vadd.f32 0.0, %v344
    %v346 = vpop.f32.mrf.mxu0
    %347 = vdwg.mxu0
    %v348 = vsel %vm231, %v340, -inf
    %349 = vmax.xlane.f32.xlu0 %v348
    %v350 = vpop.xlane.xlu0 %349
    %v351 = vsel %vm231, %v345, -inf
    %352 = vmax.xlane.f32.xlu0 %v351
    %v353 = vpop.xlane.xlu0 %352
    %v354 = vsub.f32 %v340, %v350
    %v355 = vsub.f32 %v345, %v353
    %v356 = vmul.f32 %v354, 1.442695
    %v357 = vpow.pop %v356
    %v358 = vmul.f32 %v355, 1.442695
    %v359 = vpow.pop %v358
    %v360 = vsel %vm231, %v357, 0.0
    %361 = vadd.xlane.f32.xlu0 %v360
    %v362 = vpop.xlane.xlu0 %361
    %v363 = vsel %vm231, %v359, 0.0
    %364 = vadd.xlane.f32.xlu0 %v363
    %v365 = vpop.xlane.xlu0 %364
    %v366 = vrcp.pop %v362
    %v367 = vmul.f32 %v357, %v366
    %v368 = vrcp.pop %v365
    %v369 = vmul.f32 %v359, %v368
    %371 = vrot.lane.b32.xlu0 %v264, 64
    %v372 = vpop.permute.xlu0 %371
    %v374 = vmul.f32 %v121, %v372
    %v375 = vmul.f32 %v126, %v372
    %vm376 = vcmp.ge.s32.totalorder %v132, 16
    %vm377 = vcmp.lt.s32.totalorder %v132, 24
    %vm378 = vmand %vm376, %vm377
    %v379 = vsel %vm378, 1, 0
    %v380 = vcvt.s32.f32 %v379
    %v381 = vmul.f32 %v129, %v380
    %v382 = vmul.f32 %v130, %v380
    %v384 = vsel %vm47, %v381, 0
    %v387 = vsel %vm47, %v382, 0
    %389 = vmatprep.subr.mxu0 0.0
    %390 = vmatpush1.xpose.msra.mxu0 0.0
    %391 = vmatprep.subr.mxu0 0.0
    %392 = vmatpush1.xpose.msra.mxu0 0.0
    %393 = vmatprep.subr.mxu0 0.0
    %394 = vmatpush1.xpose.msra.mxu0 0.0
    %395 = vmatprep.subr.mxu0 0.0
    %396 = vmatpush1.xpose.msra.mxu0 0.0
    %397 = vmatprep.subr.mxu0 0.0
    %398 = vmatpush1.xpose.msra.mxu0 0.0
    %399 = vmatprep.subr.mxu0 0.0
    %400 = vmatpush1.xpose.msra.mxu0 0.0
    %401 = vmatprep.subr.mxu0 0.0
    %402 = vmatpush1.xpose.msra.mxu0 0.0
    %403 = vmatprep.subr.mxu0 0.0
    %404 = vmatpush1.xpose.msra.mxu0 0.0
    %405 = vmatprep.subr.mxu0 0.0
    %406 = vmatpush1.xpose.msra.mxu0 0.0
    %407 = vmatprep.subr.mxu0 0.0
    %408 = vmatpush1.xpose.msra.mxu0 0.0
    %409 = vmatprep.subr.mxu0 0.0
    %410 = vmatpush1.xpose.msra.mxu0 0.0
    %411 = vmatprep.subr.mxu0 0.0
    %412 = vmatpush1.xpose.msra.mxu0 0.0
    %413 = vmatprep.subr.mxu0 0.0
    %414 = vmatpush1.xpose.msra.mxu0 0.0
    %415 = vmatprep.subr.mxu0 0.0
    %416 = vmatpush1.xpose.msra.mxu0 0.0
    %417 = vmatprep.subr.mxu0 0.0
    %418 = vmatpush1.xpose.msra.mxu0 %v154
    %419 = vmatprep.subr.mxu0 0.0
    %420 = vmatpush1.xpose.msra.mxu0 %v152
    %421 = vmatprep.subr.mxu0 0.0
    %422 = vmatpush2.xpose.msra.mxu0 0.0
    %423 = vmatprep.subr.mxu0 0.0
    %424 = vmatpush2.xpose.msra.mxu0 0.0
    %425 = vmatprep.subr.mxu0 0.0
    %426 = vmatpush2.xpose.msra.mxu0 0.0
    %427 = vmatprep.subr.mxu0 0.0
    %428 = vmatpush2.xpose.msra.mxu0 0.0
    %429 = vmatprep.subr.mxu0 0.0
    %430 = vmatpush2.xpose.msra.mxu0 0.0
    %431 = vmatprep.subr.mxu0 0.0
    %432 = vmatpush2.xpose.msra.mxu0 0.0
    %433 = vmatprep.subr.mxu0 0.0
    %434 = vmatpush2.xpose.msra.mxu0 0.0
    %435 = vmatprep.subr.mxu0 0.0
    %436 = vmatpush2.xpose.msra.mxu0 0.0
    %437 = vmatprep.subr.mxu0 0.0
    %438 = vmatpush2.xpose.msra.mxu0 0.0
    %439 = vmatprep.subr.mxu0 0.0
    %440 = vmatpush2.xpose.msra.mxu0 0.0
    %441 = vmatprep.subr.mxu0 0.0
    %442 = vmatpush2.xpose.msra.mxu0 0.0
    %443 = vmatprep.subr.mxu0 0.0
    %444 = vmatpush2.xpose.msra.mxu0 0.0
    %445 = vmatprep.subr.mxu0 0.0
    %446 = vmatpush2.xpose.msra.mxu0 0.0
    %447 = vmatprep.subr.mxu0 0.0
    %448 = vmatpush2.xpose.msra.mxu0 0.0
    %449 = vmatprep.subr.mxu0 0.0
    %450 = vmatpush2.xpose.msra.mxu0 0.0
    %451 = vmatprep.subr.mxu0 0.0
    %452 = vmatpush2.xpose.msra.mxu0 0.0
    %453 = vmatprep.mubr.f32.mxu0 0.0
    %454 = vmatmul.mubr.f32.gmra.mxu0 %v384
    %v455 = vpop.f32.mrf.mxu0
    %v456 = vadd.f32 0.0, %v455
    %v457 = vpop.f32.mrf.mxu0
    %458 = vmatprep.mubr.f32.mxu0 0.0
    %459 = vmatmul.mubr.f32.gmra.mxu0 %v387
    %v460 = vpop.f32.mrf.mxu0
    %v461 = vadd.f32 0.0, %v460
    %v462 = vpop.f32.mrf.mxu0
    %463 = vdwg.mxu0
    %v464 = vsel %vm231, %v456, -inf
    %465 = vmax.xlane.f32.xlu0 %v464
    %v466 = vpop.xlane.xlu0 %465
    %v467 = vsel %vm231, %v461, -inf
    %468 = vmax.xlane.f32.xlu0 %v467
    %v469 = vpop.xlane.xlu0 %468
    %v470 = vsub.f32 %v456, %v466
    %v471 = vsub.f32 %v461, %v469
    %v472 = vmul.f32 %v470, 1.442695
    %v473 = vpow.pop %v472
    %v474 = vmul.f32 %v471, 1.442695
    %v475 = vpow.pop %v474
    %v476 = vsel %vm231, %v473, 0.0
    %477 = vadd.xlane.f32.xlu0 %v476
    %v478 = vpop.xlane.xlu0 %477
    %v479 = vsel %vm231, %v475, 0.0
    %480 = vadd.xlane.f32.xlu0 %v479
    %v481 = vpop.xlane.xlu0 %480
    %v482 = vrcp.pop %v478
    %v483 = vmul.f32 %v473, %v482
    %v484 = vrcp.pop %v481
    %v485 = vmul.f32 %v475, %v484
    %487 = vrot.lane.b32.xlu0 %v380, 64
    %v488 = vpop.permute.xlu0 %487
    %v490 = vmul.f32 %v121, %v488
    %v491 = vmul.f32 %v126, %v488
    %vm492 = vcmp.ge.s32.totalorder %v132, 24
    %vm493 = vcmp.lt.s32.totalorder %v132, 32
    %vm494 = vmand %vm492, %vm493
    %v495 = vsel %vm494, 1, 0
    %v496 = vcvt.s32.f32 %v495
    %v497 = vmul.f32 %v129, %v496
    %v498 = vmul.f32 %v130, %v496
    %v500 = vsel %vm47, %v497, 0
    %v503 = vsel %vm47, %v498, 0
    %505 = vmatprep.subr.mxu0 0.0
    %506 = vmatpush1.xpose.msra.mxu0 0.0
    %507 = vmatprep.subr.mxu0 0.0
    %508 = vmatpush1.xpose.msra.mxu0 0.0
    %509 = vmatprep.subr.mxu0 0.0
    %510 = vmatpush1.xpose.msra.mxu0 0.0
    %511 = vmatprep.subr.mxu0 0.0
    %512 = vmatpush1.xpose.msra.mxu0 0.0
    %513 = vmatprep.subr.mxu0 0.0
    %514 = vmatpush1.xpose.msra.mxu0 0.0
    %515 = vmatprep.subr.mxu0 0.0
    %516 = vmatpush1.xpose.msra.mxu0 0.0
    %517 = vmatprep.subr.mxu0 0.0
    %518 = vmatpush1.xpose.msra.mxu0 0.0
    %519 = vmatprep.subr.mxu0 0.0
    %520 = vmatpush1.xpose.msra.mxu0 0.0
    %521 = vmatprep.subr.mxu0 0.0
    %522 = vmatpush1.xpose.msra.mxu0 0.0
    %523 = vmatprep.subr.mxu0 0.0
    %524 = vmatpush1.xpose.msra.mxu0 0.0
    %525 = vmatprep.subr.mxu0 0.0
    %526 = vmatpush1.xpose.msra.mxu0 0.0
    %527 = vmatprep.subr.mxu0 0.0
    %528 = vmatpush1.xpose.msra.mxu0 0.0
    %529 = vmatprep.subr.mxu0 0.0
    %530 = vmatpush1.xpose.msra.mxu0 0.0
    %531 = vmatprep.subr.mxu0 0.0
    %532 = vmatpush1.xpose.msra.mxu0 0.0
    %533 = vmatprep.subr.mxu0 0.0
    %534 = vmatpush1.xpose.msra.mxu0 %v154
    %535 = vmatprep.subr.mxu0 0.0
    %536 = vmatpush1.xpose.msra.mxu0 %v152
    %537 = vmatprep.subr.mxu0 0.0
    %538 = vmatpush2.xpose.msra.mxu0 0.0
    %539 = vmatprep.subr.mxu0 0.0
    %540 = vmatpush2.xpose.msra.mxu0 0.0
    %541 = vmatprep.subr.mxu0 0.0
    %542 = vmatpush2.xpose.msra.mxu0 0.0
    %543 = vmatprep.subr.mxu0 0.0
    %544 = vmatpush2.xpose.msra.mxu0 0.0
    %545 = vmatprep.subr.mxu0 0.0
    %546 = vmatpush2.xpose.msra.mxu0 0.0
    %547 = vmatprep.subr.mxu0 0.0
    %548 = vmatpush2.xpose.msra.mxu0 0.0
    %549 = vmatprep.subr.mxu0 0.0
    %550 = vmatpush2.xpose.msra.mxu0 0.0
    %551 = vmatprep.subr.mxu0 0.0
    %552 = vmatpush2.xpose.msra.mxu0 0.0
    %553 = vmatprep.subr.mxu0 0.0
    %554 = vmatpush2.xpose.msra.mxu0 0.0
    %555 = vmatprep.subr.mxu0 0.0
    %556 = vmatpush2.xpose.msra.mxu0 0.0
    %557 = vmatprep.subr.mxu0 0.0
    %558 = vmatpush2.xpose.msra.mxu0 0.0
    %559 = vmatprep.subr.mxu0 0.0
    %560 = vmatpush2.xpose.msra.mxu0 0.0
    %561 = vmatprep.subr.mxu0 0.0
    %562 = vmatpush2.xpose.msra.mxu0 0.0
    %563 = vmatprep.subr.mxu0 0.0
    %564 = vmatpush2.xpose.msra.mxu0 0.0
    %565 = vmatprep.subr.mxu0 0.0
    %566 = vmatpush2.xpose.msra.mxu0 0.0
    %567 = vmatprep.subr.mxu0 0.0
    %568 = vmatpush2.xpose.msra.mxu0 0.0
    %569 = vmatprep.mubr.f32.mxu0 0.0
    %570 = vmatmul.mubr.f32.gmra.mxu0 %v500
    %v571 = vpop.f32.mrf.mxu0
    %v572 = vadd.f32 0.0, %v571
    %v573 = vpop.f32.mrf.mxu0
    %574 = vmatprep.mubr.f32.mxu0 0.0
    %575 = vmatmul.mubr.f32.gmra.mxu0 %v503
    %v576 = vpop.f32.mrf.mxu0
    %v577 = vadd.f32 0.0, %v576
    %v578 = vpop.f32.mrf.mxu0
    %579 = vdwg.mxu0
    %v580 = vsel %vm231, %v572, -inf
    %581 = vmax.xlane.f32.xlu0 %v580
    %v582 = vpop.xlane.xlu0 %581
    %v583 = vsel %vm231, %v577, -inf
    %584 = vmax.xlane.f32.xlu0 %v583
    %v585 = vpop.xlane.xlu0 %584
    %v586 = vsub.f32 %v572, %v582
    %v587 = vsub.f32 %v577, %v585
    %v588 = vmul.f32 %v586, 1.442695
    %v589 = vpow.pop %v588
    %v590 = vmul.f32 %v587, 1.442695
    %v591 = vpow.pop %v590
    %v592 = vsel %vm231, %v589, 0.0
    %593 = vadd.xlane.f32.xlu0 %v592
    %v594 = vpop.xlane.xlu0 %593
    %v595 = vsel %vm231, %v591, 0.0
    %596 = vadd.xlane.f32.xlu0 %v595
    %v597 = vpop.xlane.xlu0 %596
    %v598 = vrcp.pop %v594
    %v599 = vmul.f32 %v589, %v598
    %v600 = vrcp.pop %v597
    %v601 = vmul.f32 %v591, %v600
    %603 = vrot.lane.b32.xlu0 %v496, 64
    %v604 = vpop.permute.xlu0 %603
    %v606 = vmul.f32 %v121, %v604
    %v607 = vmul.f32 %v126, %v604
    %610 = vrot.lane.b32.xlu0 %v367, 16
    %v611 = vpop.permute.xlu0 %610
    %612 = vrot.lane.b32.xlu0 %v369, 16
    %v613 = vpop.permute.xlu0 %612
    %618 = vrot.lane.b32.xlu0 %v483, 32
    %v619 = vpop.permute.xlu0 %618
    %620 = vrot.lane.b32.xlu0 %v485, 32
    %v621 = vpop.permute.xlu0 %620
    %626 = vrot.lane.b32.xlu0 %v599, 48
    %v627 = vpop.permute.xlu0 %626
    %628 = vrot.lane.b32.xlu0 %v601, 48
    %v629 = vpop.permute.xlu0 %628
    %v632 = vsel %vm231, %v251, %v611
    %v633 = vsel %vm231, %v253, %v613
    %v634 = vsel %vm47, %v632, %v619
    %v635 = vsel %vm47, %v633, %v621
    %vm636 = vcmask 392192
    %v637 = vsel %vm636, %v634, %v627
    %v638 = vsel %vm636, %v635, %v629
    %647 = vrot.lane.b32.xlu0 %v258, 64
    %v648 = vpop.permute.xlu0 %647
    %649 = vrot.lane.b32.xlu0 %v259, 64
    %v650 = vpop.permute.xlu0 %649
    %651 = vrot.lane.b32.xlu0 %v374, 64
    %v652 = vpop.permute.xlu0 %651
    %653 = vrot.lane.b32.xlu0 %v375, 64
    %v654 = vpop.permute.xlu0 %653
    %655 = vrot.lane.b32.xlu0 %v490, 64
    %v656 = vpop.permute.xlu0 %655
    %657 = vrot.lane.b32.xlu0 %v491, 64
    %v658 = vpop.permute.xlu0 %657
    %659 = vrot.lane.b32.xlu0 %v606, 64
    %v660 = vpop.permute.xlu0 %659
    %661 = vrot.lane.b32.xlu0 %v607, 64
    %v662 = vpop.permute.xlu0 %661
    %vm671 = vcmask 523264
    %v673 = vsel %vm671, %v637, 0
    %v676 = vsel %vm671, %v638, 0
    %678 = vmatprep.subr.mxu0 0.0
    %679 = vmatpush1.msra.mxu0 0.0
    %680 = vmatprep.subr.mxu0 0.0
    %681 = vmatpush1.msra.mxu0 0.0
    %682 = vmatprep.subr.mxu0 0.0
    %683 = vmatpush1.msra.mxu0 0.0
    %684 = vmatprep.subr.mxu0 0.0
    %685 = vmatpush1.msra.mxu0 0.0
    %686 = vmatprep.subr.mxu0 0.0
    %687 = vmatpush1.msra.mxu0 0.0
    %688 = vmatprep.subr.mxu0 0.0
    %689 = vmatpush1.msra.mxu0 0.0
    %690 = vmatprep.subr.mxu0 0.0
    %691 = vmatpush1.msra.mxu0 0.0
    %692 = vmatprep.subr.mxu0 0.0
    %693 = vmatpush1.msra.mxu0 0.0
    %694 = vmatprep.subr.mxu0 0.0
    %695 = vmatpush1.msra.mxu0 %v662
    %696 = vmatprep.subr.mxu0 0.0
    %697 = vmatpush1.msra.mxu0 %v660
    %698 = vmatprep.subr.mxu0 0.0
    %699 = vmatpush1.msra.mxu0 %v658
    %700 = vmatprep.subr.mxu0 0.0
    %701 = vmatpush1.msra.mxu0 %v656
    %702 = vmatprep.subr.mxu0 0.0
    %703 = vmatpush1.msra.mxu0 %v654
    %704 = vmatprep.subr.mxu0 0.0
    %705 = vmatpush1.msra.mxu0 %v652
    %706 = vmatprep.subr.mxu0 0.0
    %707 = vmatpush1.msra.mxu0 %v650
    %708 = vmatprep.subr.mxu0 0.0
    %709 = vmatpush1.msra.mxu0 %v648
    %710 = vmatprep.subr.mxu0 0.0
    %711 = vmatpush2.msra.mxu0 0.0
    %712 = vmatprep.subr.mxu0 0.0
    %713 = vmatpush2.msra.mxu0 0.0
    %714 = vmatprep.subr.mxu0 0.0
    %715 = vmatpush2.msra.mxu0 0.0
    %716 = vmatprep.subr.mxu0 0.0
    %717 = vmatpush2.msra.mxu0 0.0
    %718 = vmatprep.subr.mxu0 0.0
    %719 = vmatpush2.msra.mxu0 0.0
    %720 = vmatprep.subr.mxu0 0.0
    %721 = vmatpush2.msra.mxu0 0.0
    %722 = vmatprep.subr.mxu0 0.0
    %723 = vmatpush2.msra.mxu0 0.0
    %724 = vmatprep.subr.mxu0 0.0
    %725 = vmatpush2.msra.mxu0 0.0
    %726 = vmatprep.subr.mxu0 0.0
    %727 = vmatpush2.msra.mxu0 0.0
    %728 = vmatprep.subr.mxu0 0.0
    %729 = vmatpush2.msra.mxu0 0.0
    %730 = vmatprep.subr.mxu0 0.0
    %731 = vmatpush2.msra.mxu0 0.0
    %732 = vmatprep.subr.mxu0 0.0
    %733 = vmatpush2.msra.mxu0 0.0
    %734 = vmatprep.subr.mxu0 0.0
    %735 = vmatpush2.msra.mxu0 0.0
    %736 = vmatprep.subr.mxu0 0.0
    %737 = vmatpush2.msra.mxu0 0.0
    %738 = vmatprep.subr.mxu0 0.0
    %739 = vmatpush2.msra.mxu0 0.0
    %740 = vmatprep.subr.mxu0 0.0
    %741 = vmatpush2.msra.mxu0 0.0
    %742 = vmatprep.mubr.f32.mxu0 0.0
    %743 = vmatmul.mubr.f32.gmra.mxu0 %v673
    %v744 = vpop.f32.mrf.mxu0
    %v745 = vadd.f32 0.0, %v744
    %v746 = vpop.f32.mrf.mxu0
    %747 = vmatprep.mubr.f32.mxu0 0.0
    %748 = vmatmul.mubr.f32.gmra.mxu0 %v676
    %v749 = vpop.f32.mrf.mxu0
    %v750 = vadd.f32 0.0, %v749
    %v751 = vpop.f32.mrf.mxu0
    %752 = vdwg.mxu0
    %v754 = vsel %vm231, 0.0625, 0
    %756 = vmatprep.subr.mxu0 0.0
    %757 = vmatpush1.msra.mxu0 0.0
    %758 = vmatprep.subr.mxu0 0.0
    %759 = vmatpush1.msra.mxu0 0.0
    %760 = vmatprep.subr.mxu0 0.0
    %761 = vmatpush1.msra.mxu0 0.0
    %762 = vmatprep.subr.mxu0 0.0
    %763 = vmatpush1.msra.mxu0 0.0
    %764 = vmatprep.subr.mxu0 0.0
    %765 = vmatpush1.msra.mxu0 0.0
    %766 = vmatprep.subr.mxu0 0.0
    %767 = vmatpush1.msra.mxu0 0.0
    %768 = vmatprep.subr.mxu0 0.0
    %769 = vmatpush1.msra.mxu0 0.0
    %770 = vmatprep.subr.mxu0 0.0
    %771 = vmatpush1.msra.mxu0 0.0
    %772 = vmatprep.subr.mxu0 0.0
    %773 = vmatpush1.msra.mxu0 0.0
    %774 = vmatprep.subr.mxu0 0.0
    %775 = vmatpush1.msra.mxu0 0.0
    %776 = vmatprep.subr.mxu0 0.0
    %777 = vmatpush1.msra.mxu0 0.0
    %778 = vmatprep.subr.mxu0 0.0
    %779 = vmatpush1.msra.mxu0 0.0
    %780 = vmatprep.subr.mxu0 0.0
    %781 = vmatpush1.msra.mxu0 0.0
    %782 = vmatprep.subr.mxu0 0.0
    %783 = vmatpush1.msra.mxu0 0.0
    %784 = vmatprep.subr.mxu0 0.0
    %785 = vmatpush1.msra.mxu0 %v750
    %786 = vmatprep.subr.mxu0 0.0
    %787 = vmatpush1.msra.mxu0 %v745
    %788 = vmatprep.subr.mxu0 0.0
    %789 = vmatpush2.msra.mxu0 0.0
    %790 = vmatprep.subr.mxu0 0.0
    %791 = vmatpush2.msra.mxu0 0.0
    %792 = vmatprep.subr.mxu0 0.0
    %793 = vmatpush2.msra.mxu0 0.0
    %794 = vmatprep.subr.mxu0 0.0
    %795 = vmatpush2.msra.mxu0 0.0
    %796 = vmatprep.subr.mxu0 0.0
    %797 = vmatpush2.msra.mxu0 0.0
    %798 = vmatprep.subr.mxu0 0.0
    %799 = vmatpush2.msra.mxu0 0.0
    %800 = vmatprep.subr.mxu0 0.0
    %801 = vmatpush2.msra.mxu0 0.0
    %802 = vmatprep.subr.mxu0 0.0
    %803 = vmatpush2.msra.mxu0 0.0
    %804 = vmatprep.subr.mxu0 0.0
    %805 = vmatpush2.msra.mxu0 0.0
    %806 = vmatprep.subr.mxu0 0.0
    %807 = vmatpush2.msra.mxu0 0.0
    %808 = vmatprep.subr.mxu0 0.0
    %809 = vmatpush2.msra.mxu0 0.0
    %810 = vmatprep.subr.mxu0 0.0
    %811 = vmatpush2.msra.mxu0 0.0
    %812 = vmatprep.subr.mxu0 0.0
    %813 = vmatpush2.msra.mxu0 0.0
    %814 = vmatprep.subr.mxu0 0.0
    %815 = vmatpush2.msra.mxu0 0.0
    %816 = vmatprep.subr.mxu0 0.0
    %817 = vmatpush2.msra.mxu0 0.0
    %818 = vmatprep.subr.mxu0 0.0
    %819 = vmatpush2.msra.mxu0 0.0
    %820 = vmatprep.mubr.f32.mxu0 0.0
    %821 = vmatmul.mubr.f32.gmra.mxu0 %v754
    %v822 = vpop.f32.mrf.mxu0
    %v823 = vadd.f32 0.0, %v822
    %v824 = vpop.f32.mrf.mxu0
    %825 = vdwg.mxu0
    %v826 = vld [vmem:[#allocation5 + $0x41] ss:$0 sm:$0xff]
    %831 = vrot.lane.b32.xlu0 %v42, 32
    %v832 = vpop.permute.xlu0 %831
    %833 = vrot.lane.b32.xlu0 %v43, 32
    %v834 = vpop.permute.xlu0 %833
    %835 = vrot.lane.b32.xlu0 %v44, 32
    %v836 = vpop.permute.xlu0 %835
    %837 = vrot.lane.b32.xlu0 %v45, 32
    %v838 = vpop.permute.xlu0 %837
    %v844 = vsel %vm47, %v823, 0
    %846 = vmatprep.subr.mxu0 0.0
    %847 = vmatpush1.msra.mxu0 0.0
    %848 = vmatprep.subr.mxu0 0.0
    %849 = vmatpush1.msra.mxu0 0.0
    %850 = vmatprep.subr.mxu0 0.0
    %851 = vmatpush1.msra.mxu0 0.0
    %852 = vmatprep.subr.mxu0 0.0
    %853 = vmatpush1.msra.mxu0 0.0
    %854 = vmatprep.subr.mxu0 0.0
    %855 = vmatpush1.msra.mxu0 0.0
    %856 = vmatprep.subr.mxu0 0.0
    %857 = vmatpush1.msra.mxu0 0.0
    %858 = vmatprep.subr.mxu0 0.0
    %859 = vmatpush1.msra.mxu0 0.0
    %860 = vmatprep.subr.mxu0 0.0
    %861 = vmatpush1.msra.mxu0 0.0
    %862 = vmatprep.subr.mxu0 0.0
    %863 = vmatpush1.msra.mxu0 0.0
    %864 = vmatprep.subr.mxu0 0.0
    %865 = vmatpush1.msra.mxu0 0.0
    %866 = vmatprep.subr.mxu0 0.0
    %867 = vmatpush1.msra.mxu0 0.0
    %868 = vmatprep.subr.mxu0 0.0
    %869 = vmatpush1.msra.mxu0 0.0
    %870 = vmatprep.subr.mxu0 0.0
    %871 = vmatpush1.msra.mxu0 %v838
    %872 = vmatprep.subr.mxu0 0.0
    %873 = vmatpush1.msra.mxu0 %v836
    %874 = vmatprep.subr.mxu0 0.0
    %875 = vmatpush1.msra.mxu0 %v834
    %876 = vmatprep.subr.mxu0 0.0
    %877 = vmatpush1.msra.mxu0 %v832
    %878 = vmatprep.subr.mxu0 0.0
    %879 = vmatpush2.msra.mxu0 0.0
    %880 = vmatprep.subr.mxu0 0.0
    %881 = vmatpush2.msra.mxu0 0.0
    %882 = vmatprep.subr.mxu0 0.0
    %883 = vmatpush2.msra.mxu0 0.0
    %884 = vmatprep.subr.mxu0 0.0
    %885 = vmatpush2.msra.mxu0 0.0
    %886 = vmatprep.subr.mxu0 0.0
    %887 = vmatpush2.msra.mxu0 0.0
    %888 = vmatprep.subr.mxu0 0.0
    %889 = vmatpush2.msra.mxu0 0.0
    %890 = vmatprep.subr.mxu0 0.0
    %891 = vmatpush2.msra.mxu0 0.0
    %892 = vmatprep.subr.mxu0 0.0
    %893 = vmatpush2.msra.mxu0 0.0
    %894 = vmatprep.subr.mxu0 0.0
    %895 = vmatpush2.msra.mxu0 0.0
    %896 = vmatprep.subr.mxu0 0.0
    %897 = vmatpush2.msra.mxu0 0.0
    %898 = vmatprep.subr.mxu0 0.0
    %899 = vmatpush2.msra.mxu0 0.0
    %900 = vmatprep.subr.mxu0 0.0
    %901 = vmatpush2.msra.mxu0 0.0
    %902 = vmatprep.subr.mxu0 0.0
    %903 = vmatpush2.msra.mxu0 0.0
    %904 = vmatprep.subr.mxu0 0.0
    %905 = vmatpush2.msra.mxu0 0.0
    %906 = vmatprep.subr.mxu0 0.0
    %907 = vmatpush2.msra.mxu0 0.0
    %908 = vmatprep.subr.mxu0 0.0
    %909 = vmatpush2.msra.mxu0 0.0
    %910 = vmatprep.mubr.f32.mxu0 0.0
    %911 = vmatmul.mubr.f32.gmra.mxu0 %v844
    %v912 = vpop.f32.mrf.mxu0
    %v913 = vadd.f32 %v826, %v912
    %v914 = vpop.f32.mrf.mxu0
    %915 = vdwg.mxu0
    %v916 = vld [vmem:[#allocation5 + $0x8] sm:$0xff]
    %v917 = vld [vmem:[#allocation5 + $0x18] sm:$0xff]
    %v918 = vld [vmem:[#allocation5 + $0x28] sm:$0xff]
    %v919 = vld [vmem:[#allocation5 + $0x38] sm:$0xff]
    %v920 = vld [vmem:[#allocation5 + $0x42] ss:$0 sm:$0xff]
    %v922 = vsel %vm47, %v913, 0
    %924 = vmatprep.subr.mxu0 0.0
    %925 = vmatpush1.msra.mxu0 0.0
    %926 = vmatprep.subr.mxu0 0.0
    %927 = vmatpush1.msra.mxu0 0.0
    %928 = vmatprep.subr.mxu0 0.0
    %929 = vmatpush1.msra.mxu0 0.0
    %930 = vmatprep.subr.mxu0 0.0
    %931 = vmatpush1.msra.mxu0 0.0
    %932 = vmatprep.subr.mxu0 0.0
    %933 = vmatpush1.msra.mxu0 0.0
    %934 = vmatprep.subr.mxu0 0.0
    %935 = vmatpush1.msra.mxu0 0.0
    %936 = vmatprep.subr.mxu0 0.0
    %937 = vmatpush1.msra.mxu0 0.0
    %938 = vmatprep.subr.mxu0 0.0
    %939 = vmatpush1.msra.mxu0 0.0
    %940 = vmatprep.subr.mxu0 0.0
    %941 = vmatpush1.msra.mxu0 0.0
    %942 = vmatprep.subr.mxu0 0.0
    %943 = vmatpush1.msra.mxu0 0.0
    %944 = vmatprep.subr.mxu0 0.0
    %945 = vmatpush1.msra.mxu0 0.0
    %946 = vmatprep.subr.mxu0 0.0
    %947 = vmatpush1.msra.mxu0 0.0
    %948 = vmatprep.subr.mxu0 0.0
    %949 = vmatpush1.msra.mxu0 %v919
    %950 = vmatprep.subr.mxu0 0.0
    %951 = vmatpush1.msra.mxu0 %v918
    %952 = vmatprep.subr.mxu0 0.0
    %953 = vmatpush1.msra.mxu0 %v917
    %954 = vmatprep.subr.mxu0 0.0
    %955 = vmatpush1.msra.mxu0 %v916
    %956 = vmatprep.subr.mxu0 0.0
    %957 = vmatpush2.msra.mxu0 0.0
    %958 = vmatprep.subr.mxu0 0.0
    %959 = vmatpush2.msra.mxu0 0.0
    %960 = vmatprep.subr.mxu0 0.0
    %961 = vmatpush2.msra.mxu0 0.0
    %962 = vmatprep.subr.mxu0 0.0
    %963 = vmatpush2.msra.mxu0 0.0
    %964 = vmatprep.subr.mxu0 0.0
    %965 = vmatpush2.msra.mxu0 0.0
    %966 = vmatprep.subr.mxu0 0.0
    %967 = vmatpush2.msra.mxu0 0.0
    %968 = vmatprep.subr.mxu0 0.0
    %969 = vmatpush2.msra.mxu0 0.0
    %970 = vmatprep.subr.mxu0 0.0
    %971 = vmatpush2.msra.mxu0 0.0
    %972 = vmatprep.subr.mxu0 0.0
    %973 = vmatpush2.msra.mxu0 0.0
    %974 = vmatprep.subr.mxu0 0.0
    %975 = vmatpush2.msra.mxu0 0.0
    %976 = vmatprep.subr.mxu0 0.0
    %977 = vmatpush2.msra.mxu0 0.0
    %978 = vmatprep.subr.mxu0 0.0
    %979 = vmatpush2.msra.mxu0 0.0
    %980 = vmatprep.subr.mxu0 0.0
    %981 = vmatpush2.msra.mxu0 0.0
    %982 = vmatprep.subr.mxu0 0.0
    %983 = vmatpush2.msra.mxu0 0.0
    %984 = vmatprep.subr.mxu0 0.0
    %985 = vmatpush2.msra.mxu0 0.0
    %986 = vmatprep.subr.mxu0 0.0
    %987 = vmatpush2.msra.mxu0 0.0
    %988 = vmatprep.mubr.f32.mxu0 0.0
    %989 = vmatmul.mubr.f32.gmra.mxu0 %v922
    %v990 = vpop.f32.mrf.mxu0
    %v991 = vadd.f32 %v920, %v990
    %v992 = vpop.f32.mrf.mxu0
    %993 = vdwg.mxu0
    %v994 = vmul.f32 %v991, 0.5
    %v995 = vmul.f32 %v991, 0.044715
    %v996 = vmul.f32 %v995, %v991
    %v997 = vmul.f32 %v996, %v991
    %v998 = vadd.f32 %v991, %v997
    %v999 = vmul.f32 %v998, 0.7978846
    %v1000 = vtanh.pop %v999
    %v1001 = vadd.f32 %v1000, 1.0
    %v1002 = vmul.f32 %v994, %v1001
    %v1003 = vld [vmem:[#allocation5 + $0x43] ss:$0 sm:$0xff]
    %v1004 = vld [vmem:[#allocation5 + $0x44] ss:$0 sm:$0xff]
    %v1005 = vmul.f32 %v1002, %v1003
    %vm1006 = vcmask 253952
    %v1007 = vsel %vm1006, %v1005, 0.0
    %1008 = vadd.xlane.f32.xlu0 %v1007
    %v1009 = vpop.xlane.xlu0 %1008
    %v1010 = vadd.f32 %v1009, %v1004
    %v1011 = vsub.f32 0.0, %v1010
    %v1012 = vmul.f32 %v1011, 1.442695
    %v1013 = vpow.pop %v1012
    %v1014 = vadd.f32 %v1013, 1.0
    %v1015 = vrcp.pop %v1014
    %v1016 = vmul.f32 1.0, %v1015
    %1018 = vset.pattern.permute.xlu0 0
    %1019 = vperm.xlu0 %1018, %v1016
    %v1020 = vpop.permute.xlu0 %1019
    %1022 = vst [vmem:[#allocation7] sm:$0x1] %v1020
    // Predicated region
    $region18: #{_forward_impl.1} parent=1 // pred_check
      _
    $region19: #{_forward_impl.1} parent=1 // pred_check_branch
      %1024 = sbr.rel (0) target = $region21
    $region20: #{_forward_impl.1} parent=1 // pred_region
      %s1026 = ssub.s32 16, 16
      %1027 = vsyncadd [#allocation4], %s1026
      %s1029 = sshll.u32 [#allocation7], 4
      %s1030 = int_to_ptr.vmem [resolvable:$true] %s1029
      %1032 = dma.vmem_to_hbm [thread:$0]  %s1030, 16, %s2, [#allocation4]
    $region21: #{_forward_impl.1} parent=1 // pred_fallthru
      _
    // Predicated region
    $region22: #{_forward_impl.1} parent=1 // pred_check
      _
    $region23: #{_forward_impl.1} parent=1 // pred_check_branch
      %1034 = sbr.rel (0) target = $region25
    $region24: #{_forward_impl.1} parent=1 // pred_region
      %1035 = dma.done [#allocation4], 16
    $region25: #{_forward_impl.1} parent=1 // pred_fallthru
      _
    %1036 = vsyncpa [#allocation3], 1
    %1037 = vsyncpa [#allocation6], 1
    %1038 = vsyncpa [#allocation4], 1

</llo_original>
